<compile_context>
chip_gen: v7x
topology: tpu7x:2x2x1
jax: 0.10.0
libtpu: 0.0.40
codegen_flags: <defaults>
</compile_context>

<pallas_src>
import math

import jax
import jax.numpy as jnp
from jax.experimental import pallas as pl
from jax.experimental.pallas import tpu as pltpu


def _round_up(x, m):
    return ((x + m - 1) // m) * m


def adapter_kernel(x_ref, w1t_ref, w2t_ref, o_ref):
    """One row tile: y = ReLU(ReLU(x @ W1t) @ W2t), f32 MXU accumulation."""
    x = x_ref[...].astype(w1t_ref.dtype)          # match compute dtype (no-op by default)
    # h = x @ W1^T, weights already transposed to [K, N] layout -> plain MXU matmul.
    h = jnp.dot(x, w1t_ref[...], preferred_element_type=jnp.float32)
    h = jnp.maximum(h, 0.0).astype(w2t_ref.dtype)  # ReLU #1, back to compute dtype
    y = jnp.dot(h, w2t_ref[...], preferred_element_type=jnp.float32)
    o_ref[...] = jnp.maximum(y, 0.0).astype(o_ref.dtype)   # ReLU #2


def adapter_forward(x, w1, w2, *, row_tile=None, compute_dtype=None,
                    vmem_limit_bytes=None):
    """Adapter forward pass.

    x : (..., c_in)              activations (any leading dims, like nn.Linear)
    w1: (c_in//reduction, c_in)  first Linear weight  (PyTorch layout, no bias)
    w2: (c_in, c_in//reduction)  second Linear weight (PyTorch layout, no bias)
    compute_dtype: optional matmul operand dtype (e.g. jnp.bfloat16 on v5e/v6e
        for f32 inputs). Accumulation is always f32. Default: x.dtype (exact).
    """
    orig_shape = x.shape
    c_in = orig_shape[-1]
    hidden = w1.shape[0]
    assert w1.shape == (hidden, c_in), w1.shape
    assert w2.shape == (c_in, hidden), w2.shape

    x2d = x.reshape(-1, c_in)
    N = x2d.shape[0]

    if compute_dtype is None:
        compute_dtype = x.dtype
    # One-time tiny transposes/casts: kernel gets MXU-native [K, N] weight layout.
    w1t = w1.T.astype(compute_dtype)              # (c_in, hidden)
    w2t = w2.T.astype(compute_dtype)              # (hidden, c_in)

    x_item = jnp.dtype(x.dtype).itemsize
    w_item = jnp.dtype(compute_dtype).itemsize

    # ---- Row-tile selection --------------------------------------------------
    # Native sublane packing: 8 rows (f32), 16 (bf16), 32 (int8/fp8).
    sublane = max(8, 32 // x_item)
    if row_tile is None:
        # Large tile to amortize the ~0.35 us/step grid overhead, but keep at
        # least 2 grid steps when N allows it (megacore sharding on v7x and
        # DMA/compute overlap on all generations).
        row_tile = min(2048, _round_up(pl.cdiv(N, 2), sublane))
    row_tile = max(sublane,
                   _round_up(min(row_tile, _round_up(N, sublane)), sublane))

    def _vmem_bytes(rt, wbufs):
        return (2 * rt * c_in * x_item             # x row tiles (double-buffered)
                + 2 * rt * c_in * x_item           # out row tiles
                + wbufs * c_in * hidden * w_item   # W1^T (resident)
                + wbufs * hidden * c_in * w_item   # W2^T (resident)
                + rt * (hidden + c_in) * 4)        # f32 intermediates

    # Generation-aware VMEM budget (v5e/v6e: 128 MiB, v7x: 64 MiB per TC).
    try:
        vmem_capacity = int(pltpu.get_tpu_info().vmem_capacity_bytes)
    except Exception:
        vmem_capacity = 64 * 1024 * 1024           # smallest generation (v7x per-TC)
    vmem_target = int(0.70 * vmem_capacity)

    while row_tile > sublane and _vmem_bytes(row_tile, 2) > vmem_target:
        row_tile = max(sublane, _round_up(row_tile // 2, sublane))

    if vmem_limit_bytes is None:
        vmem_limit_bytes = min(
            vmem_capacity,
            max(int(1.25 * _vmem_bytes(row_tile, 2)), 32 * 1024 * 1024))

    # Ragged last block handled by Pallas (OOB reads are per-row garbage, OOB
    # stores are masked) -> no host-side pad/slice HBM copies.
    grid = (pl.cdiv(N, row_tile),)

    flops = 4 * N * c_in * hidden                  # two matmuls, 2 flops/MAC
    bytes_accessed = 2 * N * c_in * x_item + 2 * c_in * hidden * w_item

    def _call(single_buffer_weights):
        wkw = {}
        if single_buffer_weights and hasattr(pl, "Buffered"):
            # Constant index_map => the 2nd pipeline buffer is never used; keep
            # the resident weights single-buffered to free VMEM headroom.
            wkw = dict(pipeline_mode=pl.Buffered(1))
        in_specs = [
            pl.BlockSpec((row_tile, c_in), lambda i: (i, 0)),         # x row tile
            pl.BlockSpec((c_in, hidden), lambda i: (0, 0), **wkw),    # W1^T resident
            pl.BlockSpec((hidden, c_in), lambda i: (0, 0), **wkw),    # W2^T resident
        ]
        return pl.pallas_call(
            adapter_kernel,
            out_shape=jax.ShapeDtypeStruct((N, c_in), x.dtype),
            grid_spec=pltpu.PrefetchScalarGridSpec(
                num_scalar_prefetch=0,
                grid=grid,
                in_specs=in_specs,
                out_specs=pl.BlockSpec((row_tile, c_in), lambda i: (i, 0)),
            ),
            compiler_params=pltpu.CompilerParams(
                dimension_semantics=("parallel",),
                vmem_limit_bytes=int(vmem_limit_bytes),
            ),
            cost_estimate=pl.CostEstimate(
                flops=flops, transcendentals=0, bytes_accessed=bytes_accessed),
        )(x2d, w1t, w2t)

    try:
        out2d = _call(True)
    except Exception:
        # pl.Buffered(1) unsupported on this jax/libtpu combo: identical kernel,
        # just with default double-buffered (still resident) weights.
        out2d = _call(False)

    return out2d.reshape(orig_shape)


def adapter_reference(x, w1, w2):
    h = jnp.maximum(x @ w1.T, 0.0)
    return jnp.maximum(h @ w2.T, 0.0)


if __name__ == "__main__":
    key = jax.random.PRNGKey(0)
    k_x, k_w1, k_w2, k_x2 = jax.random.split(key, 4)

    # Adapter(c_in=128, reduction=4) on a small batch.
    c_in, reduction = 128, 4
    hidden = c_in // reduction

    bound1 = 1.0 / math.sqrt(c_in)
    bound2 = 1.0 / math.sqrt(hidden)
    w1 = jax.random.uniform(k_w1, (hidden, c_in), minval=-bound1, maxval=bound1,
                            dtype=jnp.float32)
    w2 = jax.random.uniform(k_w2, (c_in, hidden), minval=-bound2, maxval=bound2,
                            dtype=jnp.float32)

    # 1) f32, 3-D input (flattened to rows internally), auto row tile (2 steps).
    x = jax.random.normal(k_x, (2, 8, c_in), dtype=jnp.float32)
    out = jax.block_until_ready(adapter_forward(x, w1, w2))
    ref = adapter_reference(x, w1, w2)
    assert out.shape == x.shape and out.dtype == x.dtype
    assert jnp.allclose(out, ref, atol=1e-5, rtol=1e-5)

    # 2) Ragged N / multi-step grid (no host-side padding): N=20, row_tile=8.
    x2 = jax.random.normal(k_x2, (20, c_in), dtype=jnp.float32)
    out2 = jax.block_until_ready(adapter_forward(x2, w1, w2, row_tile=8))
    ref2 = adapter_reference(x2, w1, w2)
    assert out2.shape == x2.shape
    assert jnp.allclose(out2, ref2, atol=1e-5, rtol=1e-5)

    # 3) bf16 path (16-row sublane packing, bf16 hidden cast, ragged last block).
    xb = x2.astype(jnp.bfloat16)
    w1b, w2b = w1.astype(jnp.bfloat16), w2.astype(jnp.bfloat16)
    outb = jax.block_until_ready(adapter_forward(xb, w1b, w2b))
    refb = adapter_reference(xb.astype(jnp.float32),
                             w1b.astype(jnp.float32), w2b.astype(jnp.float32))
    assert outb.dtype == jnp.bfloat16
    assert jnp.allclose(outb.astype(jnp.float32), refb, atol=3e-2, rtol=3e-2)

    print("KERNEL_OK")
</pallas_src>

<mosaic_0001>
module attributes {stable_mosaic.version = 11 : i64} {
  func.func @adapter_kernel(%arg0: i32, %arg1: memref<8x128xf32, #tpu.memory_space<vmem>>, %arg2: memref<128x32xf32, #tpu.memory_space<vmem>>, %arg3: memref<32x128xf32, #tpu.memory_space<vmem>>, %arg4: memref<8x128xf32, #tpu.memory_space<vmem>>) attributes {dimension_semantics = [#tpu.dimension_semantics<parallel>], iteration_bounds = array<i64: 2>, scalar_prefetch = 0 : i64, scratch_operands = 0 : i64, tpu.core_type = #tpu.core_type<tc>, window_params = [{transform_indices = @transform_0, window_bounds = array<i64: 8, 128>}, {pipeline_mode = #tpu.pipeline_mode<synchronous>, transform_indices = @transform_1, window_bounds = array<i64: 128, 32>}, {pipeline_mode = #tpu.pipeline_mode<synchronous>, transform_indices = @transform_2, window_bounds = array<i64: 32, 128>}, {transform_indices = @transform_3, window_bounds = array<i64: 8, 128>}]} {
    %c0 = arith.constant 0 : index
    %c0_0 = arith.constant 0 : index
    %0 = vector.load %arg1[%c0, %c0_0] : memref<8x128xf32, #tpu.memory_space<vmem>>, vector<8x128xf32>
    %c0_1 = arith.constant 0 : index
    %c0_2 = arith.constant 0 : index
    %1 = vector.load %arg2[%c0_1, %c0_2] : memref<128x32xf32, #tpu.memory_space<vmem>>, vector<128x32xf32>
    %cst = arith.constant dense<0.000000e+00> : vector<8x32xf32>
    %2 = tpu.matmul %0, %1, %cst {dimension_numbers = #tpu.dot_dimension_numbers<[1], [0], [0], [1], [0, 0, 1, 1], [], []>} : vector<8x128xf32>, vector<128x32xf32>, vector<8x32xf32> -> vector<8x32xf32>
    %cst_3 = arith.constant 0.000000e+00 : f32
    %3 = vector.broadcast %cst_3 : f32 to vector<8x32xf32>
    %4 = arith.maximumf %2, %3 : vector<8x32xf32>
    %c0_4 = arith.constant 0 : index
    %c0_5 = arith.constant 0 : index
    %5 = vector.load %arg3[%c0_4, %c0_5] : memref<32x128xf32, #tpu.memory_space<vmem>>, vector<32x128xf32>
    %cst_6 = arith.constant dense<0.000000e+00> : vector<8x128xf32>
    %6 = tpu.matmul %4, %5, %cst_6 {dimension_numbers = #tpu.dot_dimension_numbers<[1], [0], [0], [1], [0, 0, 1, 1], [], []>} : vector<8x32xf32>, vector<32x128xf32>, vector<8x128xf32> -> vector<8x128xf32>
    %cst_7 = arith.constant 0.000000e+00 : f32
    %7 = vector.broadcast %cst_7 : f32 to vector<8x128xf32>
    %8 = arith.maximumf %6, %7 : vector<8x128xf32>
    %c0_8 = arith.constant 0 : index
    %c0_9 = arith.constant 0 : index
    %9 = vector.load %arg4[%c0_8, %c0_9] : memref<8x128xf32, #tpu.memory_space<vmem>>, vector<8x128xf32>
    tpu.vector_store %arg4[%c0_8, %c0_9], %8 {strides = array<i32>} : memref<8x128xf32, #tpu.memory_space<vmem>>, vector<8x128xf32>,
    return
  }
  func.func @transform_0(%arg0: i32) -> (i32, i32) {
    %c0_i32 = arith.constant 0 : i32
    %c0_i32_0 = arith.constant 0 : i32
    return %arg0, %c0_i32 : i32, i32
  }
  func.func @transform_1(%arg0: i32) -> (i32, i32) {
    %c0_i32 = arith.constant 0 : i32
    %c0_i32_0 = arith.constant 0 : i32
    %c0_i32_1 = arith.constant 0 : i32
    return %c0_i32, %c0_i32_0 : i32, i32
  }
  func.func @transform_2(%arg0: i32) -> (i32, i32) {
    %c0_i32 = arith.constant 0 : i32
    %c0_i32_0 = arith.constant 0 : i32
    %c0_i32_1 = arith.constant 0 : i32
    return %c0_i32, %c0_i32_0 : i32, i32
  }
  func.func @transform_3(%arg0: i32) -> (i32, i32) {
    %c0_i32 = arith.constant 0 : i32
    %c0_i32_0 = arith.constant 0 : i32
    return %arg0, %c0_i32 : i32, i32
  }
}

module attributes {stable_mosaic.version = 11 : i64} {
  func.func @adapter_kernel(%arg0: i32, %arg1: memref<8x128xf32, #tpu.memory_space<vmem>>, %arg2: memref<128x32xf32, #tpu.memory_space<vmem>>, %arg3: memref<32x128xf32, #tpu.memory_space<vmem>>, %arg4: memref<8x128xf32, #tpu.memory_space<vmem>>) attributes {dimension_semantics = [#tpu.dimension_semantics<parallel>], iteration_bounds = array<i64: 2>, scalar_prefetch = 0 : i64, scratch_operands = 0 : i64, tpu.core_type = #tpu.core_type<tc>, window_params = [{transform_indices = @transform_0, window_bounds = array<i64: 8, 128>}, {pipeline_mode = #tpu.pipeline_mode<synchronous>, transform_indices = @transform_1, window_bounds = array<i64: 128, 32>}, {pipeline_mode = #tpu.pipeline_mode<synchronous>, transform_indices = @transform_2, window_bounds = array<i64: 32, 128>}, {transform_indices = @transform_3, window_bounds = array<i64: 8, 128>}]} {
    %c0 = arith.constant 0 : index
    %c0_0 = arith.constant 0 : index
    %0 = vector.load %arg1[%c0, %c0_0] : memref<8x128xf32, #tpu.memory_space<vmem>>, vector<8x128xf32>
    %c0_1 = arith.constant 0 : index
    %c0_2 = arith.constant 0 : index
    %1 = vector.load %arg2[%c0_1, %c0_2] : memref<128x32xf32, #tpu.memory_space<vmem>>, vector<128x32xf32>
    %cst = arith.constant dense<0.000000e+00> : vector<8x32xf32>
    %2 = tpu.matmul %0, %1, %cst {dimension_numbers = #tpu.dot_dimension_numbers<[1], [0], [0], [1], [0, 0, 1, 1], [], []>} : vector<8x128xf32>, vector<128x32xf32>, vector<8x32xf32> -> vector<8x32xf32>
    %cst_3 = arith.constant 0.000000e+00 : f32
    %3 = vector.broadcast %cst_3 : f32 to vector<8x32xf32>
    %4 = arith.maximumf %2, %3 : vector<8x32xf32>
    %c0_4 = arith.constant 0 : index
    %c0_5 = arith.constant 0 : index
    %5 = vector.load %arg3[%c0_4, %c0_5] : memref<32x128xf32, #tpu.memory_space<vmem>>, vector<32x128xf32>
    %cst_6 = arith.constant dense<0.000000e+00> : vector<8x128xf32>
    %6 = tpu.matmul %4, %5, %cst_6 {dimension_numbers = #tpu.dot_dimension_numbers<[1], [0], [0], [1], [0, 0, 1, 1], [], []>} : vector<8x32xf32>, vector<32x128xf32>, vector<8x128xf32> -> vector<8x128xf32>
    %cst_7 = arith.constant 0.000000e+00 : f32
    %7 = vector.broadcast %cst_7 : f32 to vector<8x128xf32>
    %8 = arith.maximumf %6, %7 : vector<8x128xf32>
    %c0_8 = arith.constant 0 : index
    %c0_9 = arith.constant 0 : index
    %9 = vector.load %arg4[%c0_8, %c0_9] : memref<8x128xf32, #tpu.memory_space<vmem>>, vector<8x128xf32>
    tpu.vector_store %arg4[%c0_8, %c0_9], %8 {strides = array<i32>} : memref<8x128xf32, #tpu.memory_space<vmem>>, vector<8x128xf32>,
    return
  }
  func.func @transform_0(%arg0: i32) -> (i32, i32) {
    %c0_i32 = arith.constant 0 : i32
    %c0_i32_0 = arith.constant 0 : i32
    return %arg0, %c0_i32 : i32, i32
  }
  func.func @transform_1(%arg0: i32) -> (i32, i32) {
    %c0_i32 = arith.constant 0 : i32
    %c0_i32_0 = arith.constant 0 : i32
    %c0_i32_1 = arith.constant 0 : i32
    return %c0_i32, %c0_i32_0 : i32, i32
  }
  func.func @transform_2(%arg0: i32) -> (i32, i32) {
    %c0_i32 = arith.constant 0 : i32
    %c0_i32_0 = arith.constant 0 : i32
    %c0_i32_1 = arith.constant 0 : i32
    return %c0_i32, %c0_i32_0 : i32, i32
  }
  func.func @transform_3(%arg0: i32) -> (i32, i32) {
    %c0_i32 = arith.constant 0 : i32
    %c0_i32_0 = arith.constant 0 : i32
    return %arg0, %c0_i32 : i32, i32
  }
}

</mosaic_0001>

<llo_original>
// kernel: tpu_custom_call.1
$region0: #{tpu_custom_call.1}
  #allocation0 [shape = 'u32[]', space=smem, size = 0x4, offset = 0x4, fixed_abs, tag = 'smem constant byte address 0x4 - core index']
  #allocation1 [shape = 'u32[144,128]{1,0:T(1,128)}', space=vmem, size = 0x12000, scoped, tag = 'internal scratch']
  %s0 = inlined_call_operand.vmem [shape: f32[16,128], index: 0, kind: input, shape index: {}]
  %s1 = inlined_call_operand.vmem [shape: f32[128,32], index: 1, kind: input, shape index: {}]
  %s2 = inlined_call_operand.vmem [shape: f32[32,128], index: 2, kind: input, shape index: {}]
  %s3 = inlined_call_operand.hbm [shape: f32[16,128], index: 3, kind: output, shape index: {}]
  %s4 = sld [smem:[#allocation0]]
  $region45: #{tpu_custom_call.1} parent=0
    _
  %s6 = ssub.s32 1, %s4
  %s7 = scalar_select 0, %s6, %s4
  $region1: #{tpu_custom_call.1} parent=0
    #allocation2 [shape = 'u8[8192]{0}', space=vmem, size = 0x2000, scoped, tag = 'output window, operand 0']
    #allocation3 [shape = 's32[2]{0}', space=sflag, size = 0x8, scoped, tag = 'scoped memory for tpu_custom_call.1']
    %8 = vsyncpa [#allocation3], 0
    %s9 = scalar_lea.sflag [#allocation3], 1
    %10 = vsyncpa %s9, 0
    loop: start=0, step=1, limit=4
    $region2: #{tpu_custom_call.1} parent=1 // loop_pre_header
      _
    $region3: #{tpu_custom_call.1} parent=1 // loop_header
      %s12 = sphi 0, %s16
      %p13 = scmp.ge.s32.totalorder %s12, 4
      %s22 = sphi 0, %s24
      %s25 = sphi 0, %s22
      %s26 = sphi 0, %s25
      %s42 = sphi 0, %s26
      %s46 = sphi 0, %s46
      %s48 = sphi 0, %s46
      %s49 = sphi 0, %s48
      %s63 = sphi 0, %s49
      %s67 = sphi 0, %s67
      %s69 = sphi 0, %s67
      %s70 = sphi 0, %s69
      %s84 = sphi 0, %s70
      %s90 = sphi 0, %s92
      %s93 = sphi 0, %s90
      %s94 = sphi 0, %s93
      %s110 = sphi 0, %s94
    $region4: #{tpu_custom_call.1} parent=1 // loop_header_branch
      %15 = sbr.rel (%p13) target = $region8
    $region5: #{tpu_custom_call.1} parent=1 // loop_body
      %s17 = ssub.s32 %s12, 1
      %s18 = ssub.s32 %s12, 2
      %s19 = sadd.s32 %s12, 1
      %s20 = ssub.s32 %s12, %s19
      %p21 = scmp.eq.s32.totalorder %s20, 0
      %s23 = sadd.s32 %s22, 1
      %s24 = scalar_select %p21, %s22, %s23
      %p27 = pneg %p21
      %p28 = scmp.eq.s32.totalorder %s12, 1
      %p29 = por %p27, %p28
      %p30 = scmp.ne.s32.totalorder %s22, %s25
      %p31 = scmp.eq.s32.totalorder %s12, 0
      %p32 = por %p30, %p31
      %p33 = scmp.ne.s32.totalorder %s22, %s25
      %p34 = scmp.eq.s32.totalorder %s17, 1
      %p35 = por %p33, %p34
      %p36 = scmp.ne.s32.totalorder %s25, %s26
      %p37 = scmp.eq.s32.totalorder %s17, 0
      %p38 = por %p36, %p37
      %p39 = scmp.ne.s32.totalorder %s25, %s26
      %p40 = scmp.eq.s32.totalorder %s18, 1
      %p41 = por %p39, %p40
      %p43 = scmp.ne.s32.totalorder %s26, %s42
      %p44 = scmp.eq.s32.totalorder %s18, 0
      %p45 = por %p43, %p44
      %s47 = sadd.s32 %s46, 1
      %p50 = scmp.eq.s32.totalorder %s12, 1
      %p51 = scmp.ne.s32.totalorder %s46, %s48
      %p52 = scmp.eq.s32.totalorder %s12, 0
      %p53 = por %p51, %p52
      %p54 = scmp.ne.s32.totalorder %s46, %s48
      %p55 = scmp.eq.s32.totalorder %s17, 1
      %p56 = por %p54, %p55
      %p57 = scmp.ne.s32.totalorder %s48, %s49
      %p58 = scmp.eq.s32.totalorder %s17, 0
      %p59 = por %p57, %p58
      %p60 = scmp.ne.s32.totalorder %s48, %s49
      %p61 = scmp.eq.s32.totalorder %s18, 1
      %p62 = por %p60, %p61
      %p64 = scmp.ne.s32.totalorder %s49, %s63
      %p65 = scmp.eq.s32.totalorder %s18, 0
      %p66 = por %p64, %p65
      %s68 = sadd.s32 %s67, 1
      %p71 = scmp.eq.s32.totalorder %s12, 1
      %p72 = scmp.ne.s32.totalorder %s67, %s69
      %p73 = scmp.eq.s32.totalorder %s12, 0
      %p74 = por %p72, %p73
      %p75 = scmp.ne.s32.totalorder %s67, %s69
      %p76 = scmp.eq.s32.totalorder %s17, 1
      %p77 = por %p75, %p76
      %p78 = scmp.ne.s32.totalorder %s69, %s70
      %p79 = scmp.eq.s32.totalorder %s17, 0
      %p80 = por %p78, %p79
      %p81 = scmp.ne.s32.totalorder %s69, %s70
      %p82 = scmp.eq.s32.totalorder %s18, 1
      %p83 = por %p81, %p82
      %p85 = scmp.ne.s32.totalorder %s70, %s84
      %p86 = scmp.eq.s32.totalorder %s18, 0
      %p87 = por %p85, %p86
      %s88 = ssub.s32 %s12, %s19
      %p89 = scmp.eq.s32.totalorder %s88, 0
      %s91 = sadd.s32 %s90, 1
      %s92 = scalar_select %p89, %s90, %s91
      %p95 = pneg %p89
      %p96 = scmp.eq.s32.totalorder %s12, 1
      %p97 = por %p95, %p96
      %p98 = scmp.ne.s32.totalorder %s90, %s93
      %p99 = scmp.eq.s32.totalorder %s12, 0
      %p100 = por %p98, %p99
      %p101 = scmp.ne.s32.totalorder %s90, %s93
      %p102 = scmp.eq.s32.totalorder %s17, 1
      %p103 = por %p101, %p102
      %p104 = scmp.ne.s32.totalorder %s93, %s94
      %p105 = scmp.eq.s32.totalorder %s17, 0
      %p106 = por %p104, %p105
      %p107 = scmp.ne.s32.totalorder %s93, %s94
      %p108 = scmp.eq.s32.totalorder %s18, 1
      %p109 = por %p107, %p108
      %p111 = scmp.ne.s32.totalorder %s94, %s110
      %p112 = scmp.eq.s32.totalorder %s18, 0
      %p113 = por %p111, %p112
      %p114 = scmp.le.s32.totalorder 1, %s12
      %p115 = scmp.lt.s32.totalorder %s12, 3
      %p116 = pnand %p114, %p115
      %p117 = pneg %p116
      // Predicated region
      $region9: #{tpu_custom_call.1} parent=5 // pred_check
        _
      $region10: #{tpu_custom_call.1} parent=5 // pred_check_branch
        %119 = sbr.rel (%p116) target = $region12
      $region11: #{tpu_custom_call.1} parent=5 // pred_region
        %s120 = ssub.s32 %s12, 1
        // Predicated region
        $region13: #{tpu_custom_call.1} parent=11 // pred_check
          %p121 = pneg %p59
        $region14: #{tpu_custom_call.1} parent=11 // pred_check_branch
          %123 = sbr.rel (%p121) target = $region16
        $region15: #{tpu_custom_call.1} parent=11 // pred_region
          _
        $region16: #{tpu_custom_call.1} parent=11 // pred_fallthru
          _
        // Predicated region
        $region17: #{tpu_custom_call.1} parent=11 // pred_check
          %p124 = pneg %p80
        $region18: #{tpu_custom_call.1} parent=11 // pred_check_branch
          %126 = sbr.rel (%p124) target = $region20
        $region19: #{tpu_custom_call.1} parent=11 // pred_region
          _
        $region20: #{tpu_custom_call.1} parent=11 // pred_fallthru
          _
      $region12: #{tpu_custom_call.1} parent=5 // pred_fallthru
        _
      %p127 = scmp.lt.s32.totalorder %s12, 2
      // Predicated region
      $region21: #{tpu_custom_call.1} parent=5 // pred_check
        %p128 = pneg %p127
      $region22: #{tpu_custom_call.1} parent=5 // pred_check_branch
        %130 = sbr.rel (%p128) target = $region24
      $region23: #{tpu_custom_call.1} parent=5 // pred_region
        // Predicated region
        $region25: #{tpu_custom_call.1} parent=23 // pred_check
          %p131 = pneg %p32
        $region26: #{tpu_custom_call.1} parent=23 // pred_check_branch
          %133 = sbr.rel (%p131) target = $region28
        $region27: #{tpu_custom_call.1} parent=23 // pred_region
          %p134 = scmp.lt.s32.totalorder %s12, 1
          %s135 = scalar_select %p134, %s12, 1
          %s136 = smul.addr %s135, 8
          %s137 = scalar_lea.vmem %s0, %s136
        $region28: #{tpu_custom_call.1} parent=23 // pred_fallthru
          _
      $region24: #{tpu_custom_call.1} parent=5 // pred_fallthru
        _
      %p138 = scmp.le.s32.totalorder 1, %s12
      %p139 = scmp.lt.s32.totalorder %s12, 3
      %p140 = pnand %p138, %p139
      %p141 = pneg %p140
      // Predicated region
      $region29: #{tpu_custom_call.1} parent=5 // pred_check
        _
      $region30: #{tpu_custom_call.1} parent=5 // pred_check_branch
        %143 = sbr.rel (%p140) target = $region32
      $region31: #{tpu_custom_call.1} parent=5 // pred_region
        %s144 = ssub.s32 %s12, 1
        %p145 = scmp.lt.s32.totalorder %s17, 1
        %s146 = scalar_select %p145, %s17, 1
        %s147 = smul.addr %s146, 8
        %s148 = scalar_lea.vmem %s0, %s147
        %p149 = pneg %p38
        %p150 = pneg %p35
        %p151 = pneg %p59
        %p152 = pneg %p56
        %p153 = pneg %p80
        %p154 = pneg %p77
        %p155 = pneg %p106
        %p156 = pneg %p103
        %s157 = sand.u32 %s93, 1
        %s158 = scalar_lea.sflag [#allocation3], %s157
        %s159 = sand.u32 %s93, 1
        %s160 = smul.addr %s159, 8
        %s161 = scalar_lea.vmem [#allocation2], %s160
        %p162 = scmp.lt.s32.totalorder %s17, 1
        %s163 = scalar_select %p162, %s17, 1
        %s164 = smul.addr %s163, 8
        %s165 = scalar_lea.vmem %s0, %s164
        %v166 = vld [vmem:[%s165] sm:$0xff]
        %v167 = vld [vmem:[%s1] sm:$0xff]
        %v168 = vld [vmem:[%s1 + $0x8] sm:$0xff]
        %v169 = vld [vmem:[%s1 + $0x10] sm:$0xff]
        %v170 = vld [vmem:[%s1 + $0x18] sm:$0xff]
        %v171 = vld [vmem:[%s1 + $0x20] sm:$0xff]
        %v172 = vld [vmem:[%s1 + $0x28] sm:$0xff]
        %v173 = vld [vmem:[%s1 + $0x30] sm:$0xff]
        %v174 = vld [vmem:[%s1 + $0x38] sm:$0xff]
        %v175 = vld [vmem:[%s1 + $0x40] sm:$0xff]
        %v176 = vld [vmem:[%s1 + $0x48] sm:$0xff]
        %v177 = vld [vmem:[%s1 + $0x50] sm:$0xff]
        %v178 = vld [vmem:[%s1 + $0x58] sm:$0xff]
        %v179 = vld [vmem:[%s1 + $0x60] sm:$0xff]
        %v180 = vld [vmem:[%s1 + $0x68] sm:$0xff]
        %v181 = vld [vmem:[%s1 + $0x70] sm:$0xff]
        %v182 = vld [vmem:[%s1 + $0x78] sm:$0xff]
        %183 = vmatprep.subr.mxu0 0.0
        %184 = vmatpush1.msra.mxu0 %v167
        %185 = vmatprep.subr.mxu0 0.0
        %186 = vmatpush1.msra.mxu0 %v168
        %187 = vmatprep.subr.mxu0 0.0
        %188 = vmatpush1.msra.mxu0 %v169
        %189 = vmatprep.subr.mxu0 0.0
        %190 = vmatpush1.msra.mxu0 %v170
        %191 = vmatprep.subr.mxu0 0.0
        %192 = vmatpush1.msra.mxu0 %v171
        %193 = vmatprep.subr.mxu0 0.0
        %194 = vmatpush1.msra.mxu0 %v172
        %195 = vmatprep.subr.mxu0 0.0
        %196 = vmatpush1.msra.mxu0 %v173
        %197 = vmatprep.subr.mxu0 0.0
        %198 = vmatpush1.msra.mxu0 %v174
        %199 = vmatprep.subr.mxu0 0.0
        %200 = vmatpush1.msra.mxu0 %v175
        %201 = vmatprep.subr.mxu0 0.0
        %202 = vmatpush1.msra.mxu0 %v176
        %203 = vmatprep.subr.mxu0 0.0
        %204 = vmatpush1.msra.mxu0 %v177
        %205 = vmatprep.subr.mxu0 0.0
        %206 = vmatpush1.msra.mxu0 %v178
        %207 = vmatprep.subr.mxu0 0.0
        %208 = vmatpush1.msra.mxu0 %v179
        %209 = vmatprep.subr.mxu0 0.0
        %210 = vmatpush1.msra.mxu0 %v180
        %211 = vmatprep.subr.mxu0 0.0
        %212 = vmatpush1.msra.mxu0 %v181
        %213 = vmatprep.subr.mxu0 0.0
        %214 = vmatpush1.msra.mxu0 %v182
        %215 = vmatprep.subr.mxu0 0.0
        %216 = vmatpush1.msra.mxu0 0.0
        %217 = vmatprep.subr.mxu0 0.0
        %218 = vmatpush1.msra.mxu0 0.0
        %219 = vmatprep.subr.mxu0 0.0
        %220 = vmatpush1.msra.mxu0 0.0
        %221 = vmatprep.subr.mxu0 0.0
        %222 = vmatpush1.msra.mxu0 0.0
        %223 = vmatprep.subr.mxu0 0.0
        %224 = vmatpush1.msra.mxu0 0.0
        %225 = vmatprep.subr.mxu0 0.0
        %226 = vmatpush1.msra.mxu0 0.0
        %227 = vmatprep.subr.mxu0 0.0
        %228 = vmatpush1.msra.mxu0 0.0
        %229 = vmatprep.subr.mxu0 0.0
        %230 = vmatpush1.msra.mxu0 0.0
        %231 = vmatprep.subr.mxu0 0.0
        %232 = vmatpush1.msra.mxu0 0.0
        %233 = vmatprep.subr.mxu0 0.0
        %234 = vmatpush1.msra.mxu0 0.0
        %235 = vmatprep.subr.mxu0 0.0
        %236 = vmatpush1.msra.mxu0 0.0
        %237 = vmatprep.subr.mxu0 0.0
        %238 = vmatpush1.msra.mxu0 0.0
        %239 = vmatprep.subr.mxu0 0.0
        %240 = vmatpush1.msra.mxu0 0.0
        %241 = vmatprep.subr.mxu0 0.0
        %242 = vmatpush1.msra.mxu0 0.0
        %243 = vmatprep.subr.mxu0 0.0
        %244 = vmatpush1.msra.mxu0 0.0
        %245 = vmatprep.subr.mxu0 0.0
        %246 = vmatpush1.msra.mxu0 0.0
        %247 = vmatprep.mubr.f32.mxu0 0.0
        %248 = vmatmul.mubr.f32.gmra.mrb[0].mxu0 %v166
        %v249 = vpop.f32.mrb[0].mxu0
        %v250 = vadd.f32 0.0, %v249
        %v251 = vpop.f32.mrb[0].mxu0
        %252 = vdwg.mxu0
        %v253 = vmax.f32 %v250, 0.0
        %v254 = vld [vmem:[%s2] sm:$0xff]
        %v255 = vld [vmem:[%s2 + $0x8] sm:$0xff]
        %v256 = vld [vmem:[%s2 + $0x10] sm:$0xff]
        %v257 = vld [vmem:[%s2 + $0x18] sm:$0xff]
        %vm258 = vcmask 261120
        %v260 = vsel %vm258, %v253, 0
        %262 = vmatprep.subr.mxu0 0.0
        %263 = vmatpush1.msra.mxu0 %v254
        %264 = vmatprep.subr.mxu0 0.0
        %265 = vmatpush1.msra.mxu0 %v255
        %266 = vmatprep.subr.mxu0 0.0
        %267 = vmatpush1.msra.mxu0 %v256
        %268 = vmatprep.subr.mxu0 0.0
        %269 = vmatpush1.msra.mxu0 %v257
        %270 = vmatprep.subr.mxu0 0.0
        %271 = vmatpush1.msra.mxu0 0.0
        %272 = vmatprep.subr.mxu0 0.0
        %273 = vmatpush1.msra.mxu0 0.0
        %274 = vmatprep.subr.mxu0 0.0
        %275 = vmatpush1.msra.mxu0 0.0
        %276 = vmatprep.subr.mxu0 0.0
        %277 = vmatpush1.msra.mxu0 0.0
        %278 = vmatprep.subr.mxu0 0.0
        %279 = vmatpush1.msra.mxu0 0.0
        %280 = vmatprep.subr.mxu0 0.0
        %281 = vmatpush1.msra.mxu0 0.0
        %282 = vmatprep.subr.mxu0 0.0
        %283 = vmatpush1.msra.mxu0 0.0
        %284 = vmatprep.subr.mxu0 0.0
        %285 = vmatpush1.msra.mxu0 0.0
        %286 = vmatprep.subr.mxu0 0.0
        %287 = vmatpush1.msra.mxu0 0.0
        %288 = vmatprep.subr.mxu0 0.0
        %289 = vmatpush1.msra.mxu0 0.0
        %290 = vmatprep.subr.mxu0 0.0
        %291 = vmatpush1.msra.mxu0 0.0
        %292 = vmatprep.subr.mxu0 0.0
        %293 = vmatpush1.msra.mxu0 0.0
        %294 = vmatprep.subr.mxu0 0.0
        %295 = vmatpush1.msra.mxu0 0.0
        %296 = vmatprep.subr.mxu0 0.0
        %297 = vmatpush1.msra.mxu0 0.0
        %298 = vmatprep.subr.mxu0 0.0
        %299 = vmatpush1.msra.mxu0 0.0
        %300 = vmatprep.subr.mxu0 0.0
        %301 = vmatpush1.msra.mxu0 0.0
        %302 = vmatprep.subr.mxu0 0.0
        %303 = vmatpush1.msra.mxu0 0.0
        %304 = vmatprep.subr.mxu0 0.0
        %305 = vmatpush1.msra.mxu0 0.0
        %306 = vmatprep.subr.mxu0 0.0
        %307 = vmatpush1.msra.mxu0 0.0
        %308 = vmatprep.subr.mxu0 0.0
        %309 = vmatpush1.msra.mxu0 0.0
        %310 = vmatprep.subr.mxu0 0.0
        %311 = vmatpush1.msra.mxu0 0.0
        %312 = vmatprep.subr.mxu0 0.0
        %313 = vmatpush1.msra.mxu0 0.0
        %314 = vmatprep.subr.mxu0 0.0
        %315 = vmatpush1.msra.mxu0 0.0
        %316 = vmatprep.subr.mxu0 0.0
        %317 = vmatpush1.msra.mxu0 0.0
        %318 = vmatprep.subr.mxu0 0.0
        %319 = vmatpush1.msra.mxu0 0.0
        %320 = vmatprep.subr.mxu0 0.0
        %321 = vmatpush1.msra.mxu0 0.0
        %322 = vmatprep.subr.mxu0 0.0
        %323 = vmatpush1.msra.mxu0 0.0
        %324 = vmatprep.subr.mxu0 0.0
        %325 = vmatpush1.msra.mxu0 0.0
        %326 = vmatprep.mubr.f32.mxu0 0.0
        %327 = vmatmul.mubr.f32.gmra.mrb[0].mxu0 %v260
        %v328 = vpop.f32.mrb[0].mxu0
        %v329 = vadd.f32 0.0, %v328
        %v330 = vpop.f32.mrb[0].mxu0
        %331 = vdwg.mxu0
        %v332 = vmax.f32 %v329, 0.0
        %333 = vst [vmem:[%s161] sm:$0xff] %v332
        %s334 = sand.u32 %s93, 1
        %s335 = scalar_lea.sflag [#allocation3], %s334
        %s336 = sand.u32 %s93, 1
        %s337 = smul.addr %s336, 8
        %s338 = scalar_lea.vmem [#allocation2], %s337
        // Predicated region
        $region33: #{tpu_custom_call.1} parent=31 // pred_check
          %p339 = pneg %p103
        $region34: #{tpu_custom_call.1} parent=31 // pred_check_branch
          %341 = sbr.rel (%p339) target = $region36
        $region35: #{tpu_custom_call.1} parent=31 // pred_region
          %s343 = ssub.s32 128, 128
          %344 = vsyncadd %s335, %s343
          %s345 = smul.addr %s17, 128
          %s346 = scalar_lea.hbm %s3, %s345
          %s348 = sshll.u32 %s338, 4
          %s349 = int_to_ptr.vmem [resolvable:$true] %s348
          %351 = dma.vmem_to_hbm [thread:$0]  %s349, 128, %s346, %s335
        $region36: #{tpu_custom_call.1} parent=31 // pred_fallthru
          _
      $region32: #{tpu_custom_call.1} parent=5 // pred_fallthru
        _
      %p352 = scmp.le.s32.totalorder 2, %s12
      // Predicated region
      $region37: #{tpu_custom_call.1} parent=5 // pred_check
        %p353 = pneg %p352
      $region38: #{tpu_custom_call.1} parent=5 // pred_check_branch
        %355 = sbr.rel (%p353) target = $region40
      $region39: #{tpu_custom_call.1} parent=5 // pred_region
        %s356 = ssub.s32 %s12, 2
        // Predicated region
        $region41: #{tpu_custom_call.1} parent=39 // pred_check
          %p357 = pneg %p109
        $region42: #{tpu_custom_call.1} parent=39 // pred_check_branch
          %359 = sbr.rel (%p357) target = $region44
        $region43: #{tpu_custom_call.1} parent=39 // pred_region
          %s360 = sand.u32 %s94, 1
          %s361 = scalar_lea.sflag [#allocation3], %s360
          %s362 = sand.u32 %s94, 1
          %s363 = smul.addr %s362, 8
          %s364 = scalar_lea.vmem [#allocation2], %s363
          %365 = dma.done %s361, 128
        $region44: #{tpu_custom_call.1} parent=39 // pred_fallthru
          _
      $region40: #{tpu_custom_call.1} parent=5 // pred_fallthru
        _
    $region6: #{tpu_custom_call.1} parent=1 // loop_footer
      %s16 = sadd.s32 1, %s12
    $region7: #{tpu_custom_call.1} parent=1 // loop_footer_branch
      %11 = sbr.rel target = $region3
    $region8: #{tpu_custom_call.1} parent=1 // loop_exit
      _
    %366 = vsyncpa [#allocation3], 1
    %s367 = scalar_lea.sflag [#allocation3], 1
    %368 = vsyncpa %s367, 1

// kernel: tpu_custom_call.1
$region0: #{tpu_custom_call.1}
  #allocation0 [shape = 'u32[]', space=smem, size = 0x4, offset = 0x4, fixed_abs, tag = 'smem constant byte address 0x4 - core index']
  #allocation1 [shape = 'u32[144,128]{1,0:T(1,128)}', space=vmem, size = 0x12000, scoped, tag = 'internal scratch']
  %s0 = inlined_call_operand.vmem [shape: f32[16,128], index: 0, kind: input, shape index: {}]
  %s1 = inlined_call_operand.vmem [shape: f32[128,32], index: 1, kind: input, shape index: {}]
  %s2 = inlined_call_operand.vmem [shape: f32[32,128], index: 2, kind: input, shape index: {}]
  %s3 = inlined_call_operand.hbm [shape: f32[16,128], index: 3, kind: output, shape index: {}]
  %s4 = sld [smem:[#allocation0]]
  $region45: #{tpu_custom_call.1} parent=0
    _
  %s6 = ssub.s32 1, %s4
  %s7 = scalar_select 0, %s6, %s4
  $region1: #{tpu_custom_call.1} parent=0
    #allocation2 [shape = 'u8[8192]{0}', space=vmem, size = 0x2000, scoped, tag = 'output window, operand 0']
    #allocation3 [shape = 's32[2]{0}', space=sflag, size = 0x8, scoped, tag = 'scoped memory for tpu_custom_call.1']
    %8 = vsyncpa [#allocation3], 0
    %s9 = scalar_lea.sflag [#allocation3], 1
    %10 = vsyncpa %s9, 0
    loop: start=0, step=1, limit=4
    $region2: #{tpu_custom_call.1} parent=1 // loop_pre_header
      _
    $region3: #{tpu_custom_call.1} parent=1 // loop_header
      %s12 = sphi 0, %s16
      %p13 = scmp.ge.s32.totalorder %s12, 4
      %s22 = sphi 0, %s24
      %s25 = sphi 0, %s22
      %s26 = sphi 0, %s25
      %s42 = sphi 0, %s26
      %s46 = sphi 0, %s46
      %s48 = sphi 0, %s46
      %s49 = sphi 0, %s48
      %s63 = sphi 0, %s49
      %s67 = sphi 0, %s67
      %s69 = sphi 0, %s67
      %s70 = sphi 0, %s69
      %s84 = sphi 0, %s70
      %s90 = sphi 0, %s92
      %s93 = sphi 0, %s90
      %s94 = sphi 0, %s93
      %s110 = sphi 0, %s94
    $region4: #{tpu_custom_call.1} parent=1 // loop_header_branch
      %15 = sbr.rel (%p13) target = $region8
    $region5: #{tpu_custom_call.1} parent=1 // loop_body
      %s17 = ssub.s32 %s12, 1
      %s18 = ssub.s32 %s12, 2
      %s19 = sadd.s32 %s12, 1
      %s20 = ssub.s32 %s12, %s19
      %p21 = scmp.eq.s32.totalorder %s20, 0
      %s23 = sadd.s32 %s22, 1
      %s24 = scalar_select %p21, %s22, %s23
      %p27 = pneg %p21
      %p28 = scmp.eq.s32.totalorder %s12, 1
      %p29 = por %p27, %p28
      %p30 = scmp.ne.s32.totalorder %s22, %s25
      %p31 = scmp.eq.s32.totalorder %s12, 0
      %p32 = por %p30, %p31
      %p33 = scmp.ne.s32.totalorder %s22, %s25
      %p34 = scmp.eq.s32.totalorder %s17, 1
      %p35 = por %p33, %p34
      %p36 = scmp.ne.s32.totalorder %s25, %s26
      %p37 = scmp.eq.s32.totalorder %s17, 0
      %p38 = por %p36, %p37
      %p39 = scmp.ne.s32.totalorder %s25, %s26
      %p40 = scmp.eq.s32.totalorder %s18, 1
      %p41 = por %p39, %p40
      %p43 = scmp.ne.s32.totalorder %s26, %s42
      %p44 = scmp.eq.s32.totalorder %s18, 0
      %p45 = por %p43, %p44
      %s47 = sadd.s32 %s46, 1
      %p50 = scmp.eq.s32.totalorder %s12, 1
      %p51 = scmp.ne.s32.totalorder %s46, %s48
      %p52 = scmp.eq.s32.totalorder %s12, 0
      %p53 = por %p51, %p52
      %p54 = scmp.ne.s32.totalorder %s46, %s48
      %p55 = scmp.eq.s32.totalorder %s17, 1
      %p56 = por %p54, %p55
      %p57 = scmp.ne.s32.totalorder %s48, %s49
      %p58 = scmp.eq.s32.totalorder %s17, 0
      %p59 = por %p57, %p58
      %p60 = scmp.ne.s32.totalorder %s48, %s49
      %p61 = scmp.eq.s32.totalorder %s18, 1
      %p62 = por %p60, %p61
      %p64 = scmp.ne.s32.totalorder %s49, %s63
      %p65 = scmp.eq.s32.totalorder %s18, 0
      %p66 = por %p64, %p65
      %s68 = sadd.s32 %s67, 1
      %p71 = scmp.eq.s32.totalorder %s12, 1
      %p72 = scmp.ne.s32.totalorder %s67, %s69
      %p73 = scmp.eq.s32.totalorder %s12, 0
      %p74 = por %p72, %p73
      %p75 = scmp.ne.s32.totalorder %s67, %s69
      %p76 = scmp.eq.s32.totalorder %s17, 1
      %p77 = por %p75, %p76
      %p78 = scmp.ne.s32.totalorder %s69, %s70
      %p79 = scmp.eq.s32.totalorder %s17, 0
      %p80 = por %p78, %p79
      %p81 = scmp.ne.s32.totalorder %s69, %s70
      %p82 = scmp.eq.s32.totalorder %s18, 1
      %p83 = por %p81, %p82
      %p85 = scmp.ne.s32.totalorder %s70, %s84
      %p86 = scmp.eq.s32.totalorder %s18, 0
      %p87 = por %p85, %p86
      %s88 = ssub.s32 %s12, %s19
      %p89 = scmp.eq.s32.totalorder %s88, 0
      %s91 = sadd.s32 %s90, 1
      %s92 = scalar_select %p89, %s90, %s91
      %p95 = pneg %p89
      %p96 = scmp.eq.s32.totalorder %s12, 1
      %p97 = por %p95, %p96
      %p98 = scmp.ne.s32.totalorder %s90, %s93
      %p99 = scmp.eq.s32.totalorder %s12, 0
      %p100 = por %p98, %p99
      %p101 = scmp.ne.s32.totalorder %s90, %s93
      %p102 = scmp.eq.s32.totalorder %s17, 1
      %p103 = por %p101, %p102
      %p104 = scmp.ne.s32.totalorder %s93, %s94
      %p105 = scmp.eq.s32.totalorder %s17, 0
      %p106 = por %p104, %p105
      %p107 = scmp.ne.s32.totalorder %s93, %s94
      %p108 = scmp.eq.s32.totalorder %s18, 1
      %p109 = por %p107, %p108
      %p111 = scmp.ne.s32.totalorder %s94, %s110
      %p112 = scmp.eq.s32.totalorder %s18, 0
      %p113 = por %p111, %p112
      %p114 = scmp.le.s32.totalorder 1, %s12
      %p115 = scmp.lt.s32.totalorder %s12, 3
      %p116 = pnand %p114, %p115
      %p117 = pneg %p116
      // Predicated region
      $region9: #{tpu_custom_call.1} parent=5 // pred_check
        _
      $region10: #{tpu_custom_call.1} parent=5 // pred_check_branch
        %119 = sbr.rel (%p116) target = $region12
      $region11: #{tpu_custom_call.1} parent=5 // pred_region
        %s120 = ssub.s32 %s12, 1
        // Predicated region
        $region13: #{tpu_custom_call.1} parent=11 // pred_check
          %p121 = pneg %p59
        $region14: #{tpu_custom_call.1} parent=11 // pred_check_branch
          %123 = sbr.rel (%p121) target = $region16
        $region15: #{tpu_custom_call.1} parent=11 // pred_region
          _
        $region16: #{tpu_custom_call.1} parent=11 // pred_fallthru
          _
        // Predicated region
        $region17: #{tpu_custom_call.1} parent=11 // pred_check
          %p124 = pneg %p80
        $region18: #{tpu_custom_call.1} parent=11 // pred_check_branch
          %126 = sbr.rel (%p124) target = $region20
        $region19: #{tpu_custom_call.1} parent=11 // pred_region
          _
        $region20: #{tpu_custom_call.1} parent=11 // pred_fallthru
          _
      $region12: #{tpu_custom_call.1} parent=5 // pred_fallthru
        _
      %p127 = scmp.lt.s32.totalorder %s12, 2
      // Predicated region
      $region21: #{tpu_custom_call.1} parent=5 // pred_check
        %p128 = pneg %p127
      $region22: #{tpu_custom_call.1} parent=5 // pred_check_branch
        %130 = sbr.rel (%p128) target = $region24
      $region23: #{tpu_custom_call.1} parent=5 // pred_region
        // Predicated region
        $region25: #{tpu_custom_call.1} parent=23 // pred_check
          %p131 = pneg %p32
        $region26: #{tpu_custom_call.1} parent=23 // pred_check_branch
          %133 = sbr.rel (%p131) target = $region28
        $region27: #{tpu_custom_call.1} parent=23 // pred_region
          %p134 = scmp.lt.s32.totalorder %s12, 1
          %s135 = scalar_select %p134, %s12, 1
          %s136 = smul.addr %s135, 8
          %s137 = scalar_lea.vmem %s0, %s136
        $region28: #{tpu_custom_call.1} parent=23 // pred_fallthru
          _
      $region24: #{tpu_custom_call.1} parent=5 // pred_fallthru
        _
      %p138 = scmp.le.s32.totalorder 1, %s12
      %p139 = scmp.lt.s32.totalorder %s12, 3
      %p140 = pnand %p138, %p139
      %p141 = pneg %p140
      // Predicated region
      $region29: #{tpu_custom_call.1} parent=5 // pred_check
        _
      $region30: #{tpu_custom_call.1} parent=5 // pred_check_branch
        %143 = sbr.rel (%p140) target = $region32
      $region31: #{tpu_custom_call.1} parent=5 // pred_region
        %s144 = ssub.s32 %s12, 1
        %p145 = scmp.lt.s32.totalorder %s17, 1
        %s146 = scalar_select %p145, %s17, 1
        %s147 = smul.addr %s146, 8
        %s148 = scalar_lea.vmem %s0, %s147
        %p149 = pneg %p38
        %p150 = pneg %p35
        %p151 = pneg %p59
        %p152 = pneg %p56
        %p153 = pneg %p80
        %p154 = pneg %p77
        %p155 = pneg %p106
        %p156 = pneg %p103
        %s157 = sand.u32 %s93, 1
        %s158 = scalar_lea.sflag [#allocation3], %s157
        %s159 = sand.u32 %s93, 1
        %s160 = smul.addr %s159, 8
        %s161 = scalar_lea.vmem [#allocation2], %s160
        %p162 = scmp.lt.s32.totalorder %s17, 1
        %s163 = scalar_select %p162, %s17, 1
        %s164 = smul.addr %s163, 8
        %s165 = scalar_lea.vmem %s0, %s164
        %v166 = vld [vmem:[%s165] sm:$0xff]
        %v167 = vld [vmem:[%s1] sm:$0xff]
        %v168 = vld [vmem:[%s1 + $0x8] sm:$0xff]
        %v169 = vld [vmem:[%s1 + $0x10] sm:$0xff]
        %v170 = vld [vmem:[%s1 + $0x18] sm:$0xff]
        %v171 = vld [vmem:[%s1 + $0x20] sm:$0xff]
        %v172 = vld [vmem:[%s1 + $0x28] sm:$0xff]
        %v173 = vld [vmem:[%s1 + $0x30] sm:$0xff]
        %v174 = vld [vmem:[%s1 + $0x38] sm:$0xff]
        %v175 = vld [vmem:[%s1 + $0x40] sm:$0xff]
        %v176 = vld [vmem:[%s1 + $0x48] sm:$0xff]
        %v177 = vld [vmem:[%s1 + $0x50] sm:$0xff]
        %v178 = vld [vmem:[%s1 + $0x58] sm:$0xff]
        %v179 = vld [vmem:[%s1 + $0x60] sm:$0xff]
        %v180 = vld [vmem:[%s1 + $0x68] sm:$0xff]
        %v181 = vld [vmem:[%s1 + $0x70] sm:$0xff]
        %v182 = vld [vmem:[%s1 + $0x78] sm:$0xff]
        %183 = vmatprep.subr.mxu0 0.0
        %184 = vmatpush1.msra.mxu0 %v167
        %185 = vmatprep.subr.mxu0 0.0
        %186 = vmatpush1.msra.mxu0 %v168
        %187 = vmatprep.subr.mxu0 0.0
        %188 = vmatpush1.msra.mxu0 %v169
        %189 = vmatprep.subr.mxu0 0.0
        %190 = vmatpush1.msra.mxu0 %v170
        %191 = vmatprep.subr.mxu0 0.0
        %192 = vmatpush1.msra.mxu0 %v171
        %193 = vmatprep.subr.mxu0 0.0
        %194 = vmatpush1.msra.mxu0 %v172
        %195 = vmatprep.subr.mxu0 0.0
        %196 = vmatpush1.msra.mxu0 %v173
        %197 = vmatprep.subr.mxu0 0.0
        %198 = vmatpush1.msra.mxu0 %v174
        %199 = vmatprep.subr.mxu0 0.0
        %200 = vmatpush1.msra.mxu0 %v175
        %201 = vmatprep.subr.mxu0 0.0
        %202 = vmatpush1.msra.mxu0 %v176
        %203 = vmatprep.subr.mxu0 0.0
        %204 = vmatpush1.msra.mxu0 %v177
        %205 = vmatprep.subr.mxu0 0.0
        %206 = vmatpush1.msra.mxu0 %v178
        %207 = vmatprep.subr.mxu0 0.0
        %208 = vmatpush1.msra.mxu0 %v179
        %209 = vmatprep.subr.mxu0 0.0
        %210 = vmatpush1.msra.mxu0 %v180
        %211 = vmatprep.subr.mxu0 0.0
        %212 = vmatpush1.msra.mxu0 %v181
        %213 = vmatprep.subr.mxu0 0.0
        %214 = vmatpush1.msra.mxu0 %v182
        %215 = vmatprep.subr.mxu0 0.0
        %216 = vmatpush1.msra.mxu0 0.0
        %217 = vmatprep.subr.mxu0 0.0
        %218 = vmatpush1.msra.mxu0 0.0
        %219 = vmatprep.subr.mxu0 0.0
        %220 = vmatpush1.msra.mxu0 0.0
        %221 = vmatprep.subr.mxu0 0.0
        %222 = vmatpush1.msra.mxu0 0.0
        %223 = vmatprep.subr.mxu0 0.0
        %224 = vmatpush1.msra.mxu0 0.0
        %225 = vmatprep.subr.mxu0 0.0
        %226 = vmatpush1.msra.mxu0 0.0
        %227 = vmatprep.subr.mxu0 0.0
        %228 = vmatpush1.msra.mxu0 0.0
        %229 = vmatprep.subr.mxu0 0.0
        %230 = vmatpush1.msra.mxu0 0.0
        %231 = vmatprep.subr.mxu0 0.0
        %232 = vmatpush1.msra.mxu0 0.0
        %233 = vmatprep.subr.mxu0 0.0
        %234 = vmatpush1.msra.mxu0 0.0
        %235 = vmatprep.subr.mxu0 0.0
        %236 = vmatpush1.msra.mxu0 0.0
        %237 = vmatprep.subr.mxu0 0.0
        %238 = vmatpush1.msra.mxu0 0.0
        %239 = vmatprep.subr.mxu0 0.0
        %240 = vmatpush1.msra.mxu0 0.0
        %241 = vmatprep.subr.mxu0 0.0
        %242 = vmatpush1.msra.mxu0 0.0
        %243 = vmatprep.subr.mxu0 0.0
        %244 = vmatpush1.msra.mxu0 0.0
        %245 = vmatprep.subr.mxu0 0.0
        %246 = vmatpush1.msra.mxu0 0.0
        %247 = vmatprep.mubr.f32.mxu0 0.0
        %248 = vmatmul.mubr.f32.gmra.mrb[0].mxu0 %v166
        %v249 = vpop.f32.mrb[0].mxu0
        %v250 = vadd.f32 0.0, %v249
        %v251 = vpop.f32.mrb[0].mxu0
        %252 = vdwg.mxu0
        %v253 = vmax.f32 %v250, 0.0
        %v254 = vld [vmem:[%s2] sm:$0xff]
        %v255 = vld [vmem:[%s2 + $0x8] sm:$0xff]
        %v256 = vld [vmem:[%s2 + $0x10] sm:$0xff]
        %v257 = vld [vmem:[%s2 + $0x18] sm:$0xff]
        %vm258 = vcmask 261120
        %v260 = vsel %vm258, %v253, 0
        %262 = vmatprep.subr.mxu0 0.0
        %263 = vmatpush1.msra.mxu0 %v254
        %264 = vmatprep.subr.mxu0 0.0
        %265 = vmatpush1.msra.mxu0 %v255
        %266 = vmatprep.subr.mxu0 0.0
        %267 = vmatpush1.msra.mxu0 %v256
        %268 = vmatprep.subr.mxu0 0.0
        %269 = vmatpush1.msra.mxu0 %v257
        %270 = vmatprep.subr.mxu0 0.0
        %271 = vmatpush1.msra.mxu0 0.0
        %272 = vmatprep.subr.mxu0 0.0
        %273 = vmatpush1.msra.mxu0 0.0
        %274 = vmatprep.subr.mxu0 0.0
        %275 = vmatpush1.msra.mxu0 0.0
        %276 = vmatprep.subr.mxu0 0.0
        %277 = vmatpush1.msra.mxu0 0.0
        %278 = vmatprep.subr.mxu0 0.0
        %279 = vmatpush1.msra.mxu0 0.0
        %280 = vmatprep.subr.mxu0 0.0
        %281 = vmatpush1.msra.mxu0 0.0
        %282 = vmatprep.subr.mxu0 0.0
        %283 = vmatpush1.msra.mxu0 0.0
        %284 = vmatprep.subr.mxu0 0.0
        %285 = vmatpush1.msra.mxu0 0.0
        %286 = vmatprep.subr.mxu0 0.0
        %287 = vmatpush1.msra.mxu0 0.0
        %288 = vmatprep.subr.mxu0 0.0
        %289 = vmatpush1.msra.mxu0 0.0
        %290 = vmatprep.subr.mxu0 0.0
        %291 = vmatpush1.msra.mxu0 0.0
        %292 = vmatprep.subr.mxu0 0.0
        %293 = vmatpush1.msra.mxu0 0.0
        %294 = vmatprep.subr.mxu0 0.0
        %295 = vmatpush1.msra.mxu0 0.0
        %296 = vmatprep.subr.mxu0 0.0
        %297 = vmatpush1.msra.mxu0 0.0
        %298 = vmatprep.subr.mxu0 0.0
        %299 = vmatpush1.msra.mxu0 0.0
        %300 = vmatprep.subr.mxu0 0.0
        %301 = vmatpush1.msra.mxu0 0.0
        %302 = vmatprep.subr.mxu0 0.0
        %303 = vmatpush1.msra.mxu0 0.0
        %304 = vmatprep.subr.mxu0 0.0
        %305 = vmatpush1.msra.mxu0 0.0
        %306 = vmatprep.subr.mxu0 0.0
        %307 = vmatpush1.msra.mxu0 0.0
        %308 = vmatprep.subr.mxu0 0.0
        %309 = vmatpush1.msra.mxu0 0.0
        %310 = vmatprep.subr.mxu0 0.0
        %311 = vmatpush1.msra.mxu0 0.0
        %312 = vmatprep.subr.mxu0 0.0
        %313 = vmatpush1.msra.mxu0 0.0
        %314 = vmatprep.subr.mxu0 0.0
        %315 = vmatpush1.msra.mxu0 0.0
        %316 = vmatprep.subr.mxu0 0.0
        %317 = vmatpush1.msra.mxu0 0.0
        %318 = vmatprep.subr.mxu0 0.0
        %319 = vmatpush1.msra.mxu0 0.0
        %320 = vmatprep.subr.mxu0 0.0
        %321 = vmatpush1.msra.mxu0 0.0
        %322 = vmatprep.subr.mxu0 0.0
        %323 = vmatpush1.msra.mxu0 0.0
        %324 = vmatprep.subr.mxu0 0.0
        %325 = vmatpush1.msra.mxu0 0.0
        %326 = vmatprep.mubr.f32.mxu0 0.0
        %327 = vmatmul.mubr.f32.gmra.mrb[0].mxu0 %v260
        %v328 = vpop.f32.mrb[0].mxu0
        %v329 = vadd.f32 0.0, %v328
        %v330 = vpop.f32.mrb[0].mxu0
        %331 = vdwg.mxu0
        %v332 = vmax.f32 %v329, 0.0
        %333 = vst [vmem:[%s161] sm:$0xff] %v332
        %s334 = sand.u32 %s93, 1
        %s335 = scalar_lea.sflag [#allocation3], %s334
        %s336 = sand.u32 %s93, 1
        %s337 = smul.addr %s336, 8
        %s338 = scalar_lea.vmem [#allocation2], %s337
        // Predicated region
        $region33: #{tpu_custom_call.1} parent=31 // pred_check
          %p339 = pneg %p103
        $region34: #{tpu_custom_call.1} parent=31 // pred_check_branch
          %341 = sbr.rel (%p339) target = $region36
        $region35: #{tpu_custom_call.1} parent=31 // pred_region
          %s343 = ssub.s32 128, 128
          %344 = vsyncadd %s335, %s343
          %s345 = smul.addr %s17, 128
          %s346 = scalar_lea.hbm %s3, %s345
          %s348 = sshll.u32 %s338, 4
          %s349 = int_to_ptr.vmem [resolvable:$true] %s348
          %351 = dma.vmem_to_hbm [thread:$0]  %s349, 128, %s346, %s335
        $region36: #{tpu_custom_call.1} parent=31 // pred_fallthru
          _
      $region32: #{tpu_custom_call.1} parent=5 // pred_fallthru
        _
      %p352 = scmp.le.s32.totalorder 2, %s12
      // Predicated region
      $region37: #{tpu_custom_call.1} parent=5 // pred_check
        %p353 = pneg %p352
      $region38: #{tpu_custom_call.1} parent=5 // pred_check_branch
        %355 = sbr.rel (%p353) target = $region40
      $region39: #{tpu_custom_call.1} parent=5 // pred_region
        %s356 = ssub.s32 %s12, 2
        // Predicated region
        $region41: #{tpu_custom_call.1} parent=39 // pred_check
          %p357 = pneg %p109
        $region42: #{tpu_custom_call.1} parent=39 // pred_check_branch
          %359 = sbr.rel (%p357) target = $region44
        $region43: #{tpu_custom_call.1} parent=39 // pred_region
          %s360 = sand.u32 %s94, 1
          %s361 = scalar_lea.sflag [#allocation3], %s360
          %s362 = sand.u32 %s94, 1
          %s363 = smul.addr %s362, 8
          %s364 = scalar_lea.vmem [#allocation2], %s363
          %365 = dma.done %s361, 128
        $region44: #{tpu_custom_call.1} parent=39 // pred_fallthru
          _
      $region40: #{tpu_custom_call.1} parent=5 // pred_fallthru
        _
    $region6: #{tpu_custom_call.1} parent=1 // loop_footer
      %s16 = sadd.s32 1, %s12
    $region7: #{tpu_custom_call.1} parent=1 // loop_footer_branch
      %11 = sbr.rel target = $region3
    $region8: #{tpu_custom_call.1} parent=1 // loop_exit
      _
    %366 = vsyncpa [#allocation3], 1
    %s367 = scalar_lea.sflag [#allocation3], 1
    %368 = vsyncpa %s367, 1

</llo_original>
